<compile_context>
chip_gen: v7x
topology: tpu7x:2x2x1
jax: 0.10.0
libtpu: 0.0.40
codegen_flags: <defaults>
</compile_context>

<pallas_src>
import functools

import jax
import jax.numpy as jnp
from jax.experimental import pallas as pl
from jax.experimental.pallas import tpu as pltpu


def _conv1d_kernel(x_ref, w_ref, b_ref, o_ref, *, kernel_size, stride, tl, big_cin):
    """Channels-last Conv1d on one tile of flattened (batch x L-window) rows.

    x_ref : (TB, Lw, C_in)          input windows (Lw >= (tl-1)*stride + K)
    w_ref : (K, C_in, C_out_pad)    weights, tap-major
    b_ref : (1, 1, C_out_pad)       bias (f32, zero-padded lanes)
    o_ref : (TB, tl, C_out_pad)     output tile
    """
    c_in = x_ref.shape[-1]

    def tap(k):
        if stride == 1:
            return x_ref[:, pl.ds(k, tl), :]
        # TODO(synk): verify how the strided sublane read lowers (Mosaic dump);
        # if it becomes per-row copies, decimate one contiguous load instead.
        return x_ref[:, pl.ds(k, tl, stride=stride), :]

    if big_cin:
        # C_in is a multiple of 128: lane-axis concat is at aligned offsets, so
        # one deep-contraction matmul is the better MXU shape.
        x_col = jnp.concatenate([tap(k) for k in range(kernel_size)], axis=-1)
        w_flat = w_ref[...].reshape(kernel_size * c_in, -1)
        acc = jnp.einsum("blc,cd->bld", x_col, w_flat,
                         preferred_element_type=jnp.float32)
    else:
        # Small C_in: K register-accumulated batched matmuls, no lane packing,
        # no VMEM scratch read-modify-write.
        acc = jnp.einsum("blc,cd->bld", tap(0), w_ref[0],
                         preferred_element_type=jnp.float32)
        for k in range(1, kernel_size):
            acc = acc + jnp.einsum("blc,cd->bld", tap(k), w_ref[k],
                                   preferred_element_type=jnp.float32)

    # Bias add (f32) rides the single required store; no reshape of acc.
    o_ref[...] = (acc + b_ref[...]).astype(o_ref.dtype)


_TORCH_TO_JNP_PAD = {
    "zeros": "constant",
    "circular": "wrap",
    "replicate": "edge",
    "reflect": "reflect",
}

_LANE = 128
_SUB = 8
_TILE_BUDGET = 12 * 1024 * 1024   # double-buffered in+out tiles + weights
_ROW_TARGET = 1024                # matmul M rows per grid step
_VMEM_LIMIT = 32 * 1024 * 1024    # >= tile math with margin; <= physical on all gens


def _rup(n, m):
    return -(-n // m) * m


def cnn_encoder_forward(x, statics, weight, bias, *, stride=1, padding=1,
                        padding_mode="zeros", compute_dtype=None):
    """Pallas equivalent of CNNEncoder.forward.

    x:      (B, L, C_in)       channels-last sequence
    weight: (C_out, C_in, K)   torch Conv1d layout
    bias:   (C_out,)
    compute_dtype: optionally jnp.bfloat16 for bf16 MXU operands (f32 accum).
    returns (B, L_out, C_out)
    """
    del statics  # unused, exactly as in the PyTorch module

    B, L, C_in = x.shape
    C_out, C_in_w, K = weight.shape
    assert C_in_w == C_in

    mode = _TORCH_TO_JNP_PAD[padding_mode]
    L_out = (L + 2 * padding - K) // stride + 1
    assert L_out > 0

    out_dtype = x.dtype
    op_dtype = jnp.dtype(compute_dtype) if compute_dtype is not None else jnp.dtype(x.dtype)
    in_itemsize = op_dtype.itemsize
    out_itemsize = jnp.dtype(out_dtype).itemsize

    C_out_pad = _rup(C_out, _LANE)
    c_in_lanes = _rup(C_in, _LANE)          # lane-padded width actually held in VMEM
    w_bytes = _rup(K * C_in, _SUB) * C_out_pad * in_itemsize

    def tile_bytes(tl, tb=1):
        # Real VMEM footprint of one grid step: lane/sublane-padded widths,
        # 2x for double buffering on both the input and the output tile.
        win = (tl - 1) * stride + K
        in_b = tb * _rup(win, _SUB) * c_in_lanes * in_itemsize
        out_b = tb * _rup(tl, _SUB) * C_out_pad * out_itemsize
        return 2 * (in_b + out_b)

    # ---- TL: output rows per L-window (multiple of 8 when L is tiled) ----
    if L_out <= 512:
        TL, NL = L_out, 1
    else:
        TL = 512
        while TL > 8 and tile_bytes(TL) + w_bytes > _TILE_BUDGET:
            TL //= 2
        NL = -(-L_out // TL)

    # ---- TB: windows per grid step ----
    N_win = B * NL
    tb_rows = max(1, -(-_ROW_TARGET // TL))
    tb_vmem = max(1, (_TILE_BUDGET - w_bytes) // max(1, tile_bytes(TL)))
    tb_cap = max(1, min(tb_rows, tb_vmem, N_win))
    if N_win >= 2:                     # v7x: keep >= 2 grid steps so both TCs run
        tb_cap = min(tb_cap, max(1, N_win // 2))
    divisors = [d for d in range(1, tb_cap + 1) if N_win % d == 0]
    TB = divisors[-1] if divisors[-1] >= max(1, tb_cap // 2) else tb_cap
    N_win_pad = _rup(N_win, TB)

    # ---- padded input: halo + right fill + window/batch pad, merged for 'zeros' ----
    L_need = (NL * TL - 1) * stride + K
    right_r = max(0, L_need - (L + padding))
    pad_win = N_win_pad - N_win
    pad_b = pad_win if NL == 1 else 0
    if mode == "constant":
        x_p = jnp.pad(x, ((0, pad_b), (padding, right_r), (0, 0)))
    else:
        halo_r = min(right_r, padding)
        x_p = jnp.pad(x, ((0, 0), (padding, halo_r), (0, 0)), mode=mode)
        if pad_b or right_r > halo_r:
            x_p = jnp.pad(x_p, ((0, pad_b), (0, right_r - halo_r), (0, 0)))

    # ---- window slab: (N_win_pad, win_len, C_in); leading axis is the grid ----
    if NL == 1:
        x_win = x_p
    else:
        win_len = (TL - 1) * stride + K
        slabs = [x_p[:, w * TL * stride: w * TL * stride + win_len, :][:, None]
                 for w in range(NL)]
        x_win = jnp.concatenate(slabs, axis=1).reshape(B * NL, win_len, C_in)
        if pad_win:
            x_win = jnp.pad(x_win, ((0, pad_win), (0, 0), (0, 0)))
    # TODO(synk): an Element-indexed input BlockSpec could stream the halo
    # windows straight from HBM and avoid the tiny (K-stride)/TL duplication.
    Lw = x_win.shape[1]

    # ---- weights / bias: lane-dense C_out ----
    if C_out_pad != C_out:
        weight = jnp.pad(weight, ((0, C_out_pad - C_out), (0, 0), (0, 0)))
        bias = jnp.pad(bias, ((0, C_out_pad - C_out),))
    w_kco = jnp.transpose(weight, (2, 1, 0))            # (K, C_in, C_out_pad)
    bias_row = bias.reshape(1, 1, C_out_pad).astype(jnp.float32)
    if compute_dtype is not None:
        x_win = x_win.astype(compute_dtype)
        w_kco = w_kco.astype(compute_dtype)
    else:
        w_kco = w_kco.astype(x.dtype)

    big_cin = (C_in % _LANE == 0)
    kernel = functools.partial(_conv1d_kernel, kernel_size=K, stride=stride,
                               tl=TL, big_cin=big_cin)

    cost = pl.CostEstimate(
        flops=2 * B * L_out * K * C_in * C_out,
        transcendentals=0,
        bytes_accessed=int(x.size * in_itemsize
                           + K * C_in * C_out_pad * in_itemsize
                           + B * L_out * C_out_pad * out_itemsize),
    )

    out = pl.pallas_call(
        kernel,
        out_shape=jax.ShapeDtypeStruct((N_win_pad, TL, C_out_pad), out_dtype),
        grid_spec=pltpu.PrefetchScalarGridSpec(
            num_scalar_prefetch=0,
            grid=(N_win_pad // TB,),
            in_specs=[
                pl.BlockSpec((TB, Lw, C_in), lambda g: (g, 0, 0)),
                pl.BlockSpec((K, C_in, C_out_pad), lambda g: (0, 0, 0)),
                pl.BlockSpec((1, 1, C_out_pad), lambda g: (0, 0, 0)),
            ],
            out_specs=pl.BlockSpec((TB, TL, C_out_pad), lambda g: (g, 0, 0)),
        ),
        compiler_params=pltpu.CompilerParams(
            dimension_semantics=("parallel",),
            vmem_limit_bytes=_VMEM_LIMIT,
        ),
        cost_estimate=cost,
    )(x_win, w_kco, bias_row)

    out = out[:N_win]
    if NL > 1:
        out = out.reshape(B, NL * TL, C_out_pad)[:, :L_out, :C_out]
    else:
        out = out[:, :, :C_out]
    return out


if __name__ == "__main__":
    def _torch_ref(x, weight, bias, stride, padding):
        r = jax.lax.conv_general_dilated(
            jnp.transpose(x, (0, 2, 1)),          # (B, C_in, L)
            weight,                               # (O, I, K)
            window_strides=(stride,),
            padding=[(padding, padding)],
            dimension_numbers=("NCH", "OIH", "NCH"))
        return jnp.transpose(r, (0, 2, 1)) + bias[None, None, :]

    key = jax.random.PRNGKey(0)

    # --- test 1: small shapes consistent with the module's forward ---
    B, L, C_in, C_out, K = 2, 16, 4, 32, 3
    stride, padding = 1, 1
    k1, k2, k3, k4, key = jax.random.split(key, 5)
    x = jax.random.normal(k1, (B, L, C_in), dtype=jnp.float32)
    statics = jax.random.normal(k2, (B, 8), dtype=jnp.float32)  # unused by forward
    bound = 1.0 / (C_in * K) ** 0.5
    weight = jax.random.uniform(k3, (C_out, C_in, K), jnp.float32, -bound, bound)
    bias = jax.random.uniform(k4, (C_out,), jnp.float32, -bound, bound)

    out = jax.block_until_ready(cnn_encoder_forward(
        x, statics, weight, bias, stride=stride, padding=padding,
        padding_mode="zeros"))
    ref = _torch_ref(x, weight, bias, stride, padding)
    assert out.shape == ref.shape == (B, L, C_out)
    assert jnp.allclose(out, ref, atol=1e-5, rtol=1e-5)

    # --- test 2: longer sequence, exercises the L-window tiling path ---
    B, L, C_in, C_out, K = 2, 1200, 4, 48, 5
    stride, padding = 1, 2
    k1, k3, k4, key = jax.random.split(key, 4)
    x = jax.random.normal(k1, (B, L, C_in), dtype=jnp.float32)
    bound = 1.0 / (C_in * K) ** 0.5
    weight = jax.random.uniform(k3, (C_out, C_in, K), jnp.float32, -bound, bound)
    bias = jax.random.uniform(k4, (C_out,), jnp.float32, -bound, bound)

    out = jax.block_until_ready(cnn_encoder_forward(
        x, None, weight, bias, stride=stride, padding=padding,
        padding_mode="zeros"))
    ref = _torch_ref(x, weight, bias, stride, padding)
    assert out.shape == ref.shape
    assert jnp.allclose(out, ref, atol=1e-4, rtol=1e-4)

    print("KERNEL_OK")
</pallas_src>

<mosaic_0001>
module attributes {stable_mosaic.version = 11 : i64} {
  func.func @_conv1d_kernel(%arg0: i32, %arg1: memref<1x18x4xf32, #tpu.memory_space<vmem>>, %arg2: memref<3x4x128xf32, #tpu.memory_space<vmem>>, %arg3: memref<1x1x128xf32, #tpu.memory_space<vmem>>, %arg4: memref<1x16x128xf32, #tpu.memory_space<vmem>>) attributes {dimension_semantics = [#tpu.dimension_semantics<parallel>], iteration_bounds = array<i64: 2>, scalar_prefetch = 0 : i64, scratch_operands = 0 : i64, tpu.core_type = #tpu.core_type<tc>, window_params = [{transform_indices = @transform_0, window_bounds = array<i64: 1, 18, 4>}, {pipeline_mode = #tpu.pipeline_mode<synchronous>, transform_indices = @transform_1, window_bounds = array<i64: 3, 4, 128>}, {pipeline_mode = #tpu.pipeline_mode<synchronous>, transform_indices = @transform_2, window_bounds = array<i64: 1, 1, 128>}, {transform_indices = @transform_3, window_bounds = array<i64: 1, 16, 128>}]} {
    %c0 = arith.constant 0 : index
    %c0_0 = arith.constant 0 : index
    %c0_1 = arith.constant 0 : index
    %0 = vector.load %arg1[%c0, %c0_0, %c0_1] : memref<1x18x4xf32, #tpu.memory_space<vmem>>, vector<1x16x4xf32>
    %c0_2 = arith.constant 0 : index
    %c0_3 = arith.constant 0 : index
    %c0_4 = arith.constant 0 : index
    %1 = vector.load %arg2[%c0_2, %c0_3, %c0_4] : memref<3x4x128xf32, #tpu.memory_space<vmem>>, vector<1x4x128xf32>
    %2 = vector.shape_cast %1 : vector<1x4x128xf32> to vector<4x128xf32>
    "tpu.trace_start"() <{level = 10 : i32, message = "blc,cd->bld"}> : () -> ()
    %cst = arith.constant dense<0.000000e+00> : vector<1x16x128xf32>
    %3 = tpu.matmul %0, %2, %cst {dimension_numbers = #tpu.dot_dimension_numbers<[2], [0], [0, 1], [1], [0, 0, 0, 1, 1, 1], [], []>} : vector<1x16x4xf32>, vector<4x128xf32>, vector<1x16x128xf32> -> vector<1x16x128xf32>
    "tpu.trace_stop"() : () -> ()
    %c0_5 = arith.constant 0 : index
    %c1 = arith.constant 1 : index
    %c0_6 = arith.constant 0 : index
    %4 = vector.load %arg1[%c0_5, %c1, %c0_6] : memref<1x18x4xf32, #tpu.memory_space<vmem>>, vector<1x16x4xf32>
    %c1_7 = arith.constant 1 : index
    %c0_8 = arith.constant 0 : index
    %c0_9 = arith.constant 0 : index
    %5 = vector.load %arg2[%c1_7, %c0_8, %c0_9] : memref<3x4x128xf32, #tpu.memory_space<vmem>>, vector<1x4x128xf32>
    %6 = vector.shape_cast %5 : vector<1x4x128xf32> to vector<4x128xf32>
    "tpu.trace_start"() <{level = 10 : i32, message = "blc,cd->bld"}> : () -> ()
    %cst_10 = arith.constant dense<0.000000e+00> : vector<1x16x128xf32>
    %7 = tpu.matmul %4, %6, %cst_10 {dimension_numbers = #tpu.dot_dimension_numbers<[2], [0], [0, 1], [1], [0, 0, 0, 1, 1, 1], [], []>} : vector<1x16x4xf32>, vector<4x128xf32>, vector<1x16x128xf32> -> vector<1x16x128xf32>
    "tpu.trace_stop"() : () -> ()
    %8 = arith.addf %3, %7 : vector<1x16x128xf32>
    %c0_11 = arith.constant 0 : index
    %c2 = arith.constant 2 : index
    %c0_12 = arith.constant 0 : index
    %9 = vector.load %arg1[%c0_11, %c2, %c0_12] : memref<1x18x4xf32, #tpu.memory_space<vmem>>, vector<1x16x4xf32>
    %c2_13 = arith.constant 2 : index
    %c0_14 = arith.constant 0 : index
    %c0_15 = arith.constant 0 : index
    %10 = vector.load %arg2[%c2_13, %c0_14, %c0_15] : memref<3x4x128xf32, #tpu.memory_space<vmem>>, vector<1x4x128xf32>
    %11 = vector.shape_cast %10 : vector<1x4x128xf32> to vector<4x128xf32>
    "tpu.trace_start"() <{level = 10 : i32, message = "blc,cd->bld"}> : () -> ()
    %cst_16 = arith.constant dense<0.000000e+00> : vector<1x16x128xf32>
    %12 = tpu.matmul %9, %11, %cst_16 {dimension_numbers = #tpu.dot_dimension_numbers<[2], [0], [0, 1], [1], [0, 0, 0, 1, 1, 1], [], []>} : vector<1x16x4xf32>, vector<4x128xf32>, vector<1x16x128xf32> -> vector<1x16x128xf32>
    "tpu.trace_stop"() : () -> ()
    %13 = arith.addf %8, %12 : vector<1x16x128xf32>
    %c0_17 = arith.constant 0 : index
    %c0_18 = arith.constant 0 : index
    %c0_19 = arith.constant 0 : index
    %14 = vector.load %arg3[%c0_17, %c0_18, %c0_19] : memref<1x1x128xf32, #tpu.memory_space<vmem>>, vector<1x1x128xf32>
    %15 = vector.broadcast %14 : vector<1x1x128xf32> to vector<1x16x128xf32>
    %16 = arith.addf %13, %15 : vector<1x16x128xf32>
    %c0_20 = arith.constant 0 : index
    %c0_21 = arith.constant 0 : index
    %c0_22 = arith.constant 0 : index
    %17 = vector.load %arg4[%c0_20, %c0_21, %c0_22] : memref<1x16x128xf32, #tpu.memory_space<vmem>>, vector<1x16x128xf32>
    tpu.vector_store %arg4[%c0_20, %c0_21, %c0_22], %16 {strides = array<i32>} : memref<1x16x128xf32, #tpu.memory_space<vmem>>, vector<1x16x128xf32>,
    return
  }
  func.func @transform_0(%arg0: i32) -> (i32, i32, i32) {
    %c0_i32 = arith.constant 0 : i32
    %c0_i32_0 = arith.constant 0 : i32
    %c0_i32_1 = arith.constant 0 : i32
    return %arg0, %c0_i32, %c0_i32_0 : i32, i32, i32
  }
  func.func @transform_1(%arg0: i32) -> (i32, i32, i32) {
    %c0_i32 = arith.constant 0 : i32
    %c0_i32_0 = arith.constant 0 : i32
    %c0_i32_1 = arith.constant 0 : i32
    %c0_i32_2 = arith.constant 0 : i32
    return %c0_i32, %c0_i32_0, %c0_i32_1 : i32, i32, i32
  }
  func.func @transform_2(%arg0: i32) -> (i32, i32, i32) {
    %c0_i32 = arith.constant 0 : i32
    %c0_i32_0 = arith.constant 0 : i32
    %c0_i32_1 = arith.constant 0 : i32
    %c0_i32_2 = arith.constant 0 : i32
    return %c0_i32, %c0_i32_0, %c0_i32_1 : i32, i32, i32
  }
  func.func @transform_3(%arg0: i32) -> (i32, i32, i32) {
    %c0_i32 = arith.constant 0 : i32
    %c0_i32_0 = arith.constant 0 : i32
    %c0_i32_1 = arith.constant 0 : i32
    return %arg0, %c0_i32, %c0_i32_0 : i32, i32, i32
  }
}

</mosaic_0001>

<llo_original>
// kernel: tpu_custom_call.1
$region0: #{tpu_custom_call.1}
  #allocation0 [shape = 'u32[]', space=smem, size = 0x4, offset = 0x4, fixed_abs, tag = 'smem constant byte address 0x4 - core index']
  #allocation1 [shape = 'u32[144,128]{1,0:T(1,128)}', space=vmem, size = 0x12000, scoped, tag = 'internal scratch']
  %s0 = inlined_call_operand.vmem [shape: f32[2,18,4], index: 0, kind: input, shape index: {}]
  %s1 = inlined_call_operand.vmem [shape: f32[3,4,128], index: 1, kind: input, shape index: {}]
  %s2 = inlined_call_operand.vmem [shape: f32[1,1,128], index: 2, kind: input, shape index: {}]
  %s3 = inlined_call_operand.hbm [shape: f32[2,16,128], index: 3, kind: output, shape index: {}]
  %s4 = sld [smem:[#allocation0]]
  $region45: #{tpu_custom_call.1} parent=0
    _
  %s6 = ssub.s32 1, %s4
  %s7 = scalar_select 0, %s6, %s4
  $region1: #{tpu_custom_call.1} parent=0
    #allocation2 [shape = 'u8[16384]{0}', space=vmem, size = 0x4000, scoped, tag = 'output window, operand 0']
    #allocation3 [shape = 's32[2]{0}', space=sflag, size = 0x8, scoped, tag = 'scoped memory for tpu_custom_call.1']
    %8 = vsyncpa [#allocation3], 0
    %s9 = scalar_lea.sflag [#allocation3], 1
    %10 = vsyncpa %s9, 0
    loop: start=0, step=1, limit=4
    $region2: #{tpu_custom_call.1} parent=1 // loop_pre_header
      _
    $region3: #{tpu_custom_call.1} parent=1 // loop_header
      %s12 = sphi 0, %s16
      %p13 = scmp.ge.s32.totalorder %s12, 4
      %s22 = sphi 0, %s24
      %s25 = sphi 0, %s22
      %s26 = sphi 0, %s25
      %s42 = sphi 0, %s26
      %s46 = sphi 0, %s46
      %s48 = sphi 0, %s46
      %s49 = sphi 0, %s48
      %s63 = sphi 0, %s49
      %s67 = sphi 0, %s67
      %s69 = sphi 0, %s67
      %s70 = sphi 0, %s69
      %s84 = sphi 0, %s70
      %s90 = sphi 0, %s92
      %s93 = sphi 0, %s90
      %s94 = sphi 0, %s93
      %s110 = sphi 0, %s94
    $region4: #{tpu_custom_call.1} parent=1 // loop_header_branch
      %15 = sbr.rel (%p13) target = $region8
    $region5: #{tpu_custom_call.1} parent=1 // loop_body
      %s17 = ssub.s32 %s12, 1
      %s18 = ssub.s32 %s12, 2
      %s19 = sadd.s32 %s12, 1
      %s20 = ssub.s32 %s12, %s19
      %p21 = scmp.eq.s32.totalorder %s20, 0
      %s23 = sadd.s32 %s22, 1
      %s24 = scalar_select %p21, %s22, %s23
      %p27 = pneg %p21
      %p28 = scmp.eq.s32.totalorder %s12, 1
      %p29 = por %p27, %p28
      %p30 = scmp.ne.s32.totalorder %s22, %s25
      %p31 = scmp.eq.s32.totalorder %s12, 0
      %p32 = por %p30, %p31
      %p33 = scmp.ne.s32.totalorder %s22, %s25
      %p34 = scmp.eq.s32.totalorder %s17, 1
      %p35 = por %p33, %p34
      %p36 = scmp.ne.s32.totalorder %s25, %s26
      %p37 = scmp.eq.s32.totalorder %s17, 0
      %p38 = por %p36, %p37
      %p39 = scmp.ne.s32.totalorder %s25, %s26
      %p40 = scmp.eq.s32.totalorder %s18, 1
      %p41 = por %p39, %p40
      %p43 = scmp.ne.s32.totalorder %s26, %s42
      %p44 = scmp.eq.s32.totalorder %s18, 0
      %p45 = por %p43, %p44
      %s47 = sadd.s32 %s46, 1
      %p50 = scmp.eq.s32.totalorder %s12, 1
      %p51 = scmp.ne.s32.totalorder %s46, %s48
      %p52 = scmp.eq.s32.totalorder %s12, 0
      %p53 = por %p51, %p52
      %p54 = scmp.ne.s32.totalorder %s46, %s48
      %p55 = scmp.eq.s32.totalorder %s17, 1
      %p56 = por %p54, %p55
      %p57 = scmp.ne.s32.totalorder %s48, %s49
      %p58 = scmp.eq.s32.totalorder %s17, 0
      %p59 = por %p57, %p58
      %p60 = scmp.ne.s32.totalorder %s48, %s49
      %p61 = scmp.eq.s32.totalorder %s18, 1
      %p62 = por %p60, %p61
      %p64 = scmp.ne.s32.totalorder %s49, %s63
      %p65 = scmp.eq.s32.totalorder %s18, 0
      %p66 = por %p64, %p65
      %s68 = sadd.s32 %s67, 1
      %p71 = scmp.eq.s32.totalorder %s12, 1
      %p72 = scmp.ne.s32.totalorder %s67, %s69
      %p73 = scmp.eq.s32.totalorder %s12, 0
      %p74 = por %p72, %p73
      %p75 = scmp.ne.s32.totalorder %s67, %s69
      %p76 = scmp.eq.s32.totalorder %s17, 1
      %p77 = por %p75, %p76
      %p78 = scmp.ne.s32.totalorder %s69, %s70
      %p79 = scmp.eq.s32.totalorder %s17, 0
      %p80 = por %p78, %p79
      %p81 = scmp.ne.s32.totalorder %s69, %s70
      %p82 = scmp.eq.s32.totalorder %s18, 1
      %p83 = por %p81, %p82
      %p85 = scmp.ne.s32.totalorder %s70, %s84
      %p86 = scmp.eq.s32.totalorder %s18, 0
      %p87 = por %p85, %p86
      %s88 = ssub.s32 %s12, %s19
      %p89 = scmp.eq.s32.totalorder %s88, 0
      %s91 = sadd.s32 %s90, 1
      %s92 = scalar_select %p89, %s90, %s91
      %p95 = pneg %p89
      %p96 = scmp.eq.s32.totalorder %s12, 1
      %p97 = por %p95, %p96
      %p98 = scmp.ne.s32.totalorder %s90, %s93
      %p99 = scmp.eq.s32.totalorder %s12, 0
      %p100 = por %p98, %p99
      %p101 = scmp.ne.s32.totalorder %s90, %s93
      %p102 = scmp.eq.s32.totalorder %s17, 1
      %p103 = por %p101, %p102
      %p104 = scmp.ne.s32.totalorder %s93, %s94
      %p105 = scmp.eq.s32.totalorder %s17, 0
      %p106 = por %p104, %p105
      %p107 = scmp.ne.s32.totalorder %s93, %s94
      %p108 = scmp.eq.s32.totalorder %s18, 1
      %p109 = por %p107, %p108
      %p111 = scmp.ne.s32.totalorder %s94, %s110
      %p112 = scmp.eq.s32.totalorder %s18, 0
      %p113 = por %p111, %p112
      %p114 = scmp.le.s32.totalorder 1, %s12
      %p115 = scmp.lt.s32.totalorder %s12, 3
      %p116 = pnand %p114, %p115
      %p117 = pneg %p116
      // Predicated region
      $region9: #{tpu_custom_call.1} parent=5 // pred_check
        _
      $region10: #{tpu_custom_call.1} parent=5 // pred_check_branch
        %119 = sbr.rel (%p116) target = $region12
      $region11: #{tpu_custom_call.1} parent=5 // pred_region
        %s120 = ssub.s32 %s12, 1
        // Predicated region
        $region13: #{tpu_custom_call.1} parent=11 // pred_check
          %p121 = pneg %p59
        $region14: #{tpu_custom_call.1} parent=11 // pred_check_branch
          %123 = sbr.rel (%p121) target = $region16
        $region15: #{tpu_custom_call.1} parent=11 // pred_region
          _
        $region16: #{tpu_custom_call.1} parent=11 // pred_fallthru
          _
        // Predicated region
        $region17: #{tpu_custom_call.1} parent=11 // pred_check
          %p124 = pneg %p80
        $region18: #{tpu_custom_call.1} parent=11 // pred_check_branch
          %126 = sbr.rel (%p124) target = $region20
        $region19: #{tpu_custom_call.1} parent=11 // pred_region
          _
        $region20: #{tpu_custom_call.1} parent=11 // pred_fallthru
          _
      $region12: #{tpu_custom_call.1} parent=5 // pred_fallthru
        _
      %p127 = scmp.lt.s32.totalorder %s12, 2
      // Predicated region
      $region21: #{tpu_custom_call.1} parent=5 // pred_check
        %p128 = pneg %p127
      $region22: #{tpu_custom_call.1} parent=5 // pred_check_branch
        %130 = sbr.rel (%p128) target = $region24
      $region23: #{tpu_custom_call.1} parent=5 // pred_region
        // Predicated region
        $region25: #{tpu_custom_call.1} parent=23 // pred_check
          %p131 = pneg %p32
        $region26: #{tpu_custom_call.1} parent=23 // pred_check_branch
          %133 = sbr.rel (%p131) target = $region28
        $region27: #{tpu_custom_call.1} parent=23 // pred_region
          %p134 = scmp.lt.s32.totalorder %s12, 1
          %s135 = scalar_select %p134, %s12, 1
          %s136 = smul.addr %s135, 3
          %s137 = smul.addr %s136, 8
          %s138 = scalar_lea.vmem %s0, %s137
        $region28: #{tpu_custom_call.1} parent=23 // pred_fallthru
          _
      $region24: #{tpu_custom_call.1} parent=5 // pred_fallthru
        _
      %p139 = scmp.le.s32.totalorder 1, %s12
      %p140 = scmp.lt.s32.totalorder %s12, 3
      %p141 = pnand %p139, %p140
      %p142 = pneg %p141
      // Predicated region
      $region29: #{tpu_custom_call.1} parent=5 // pred_check
        _
      $region30: #{tpu_custom_call.1} parent=5 // pred_check_branch
        %144 = sbr.rel (%p141) target = $region32
      $region31: #{tpu_custom_call.1} parent=5 // pred_region
        %s145 = ssub.s32 %s12, 1
        %p146 = scmp.lt.s32.totalorder %s17, 1
        %s147 = scalar_select %p146, %s17, 1
        %s148 = smul.addr %s147, 3
        %s149 = smul.addr %s148, 8
        %s150 = scalar_lea.vmem %s0, %s149
        %p151 = pneg %p38
        %p152 = pneg %p35
        %p153 = pneg %p59
        %p154 = pneg %p56
        %p155 = pneg %p80
        %p156 = pneg %p77
        %p157 = pneg %p106
        %p158 = pneg %p103
        %s159 = sand.u32 %s93, 1
        %s160 = scalar_lea.sflag [#allocation3], %s159
        %s161 = sand.u32 %s93, 1
        %s162 = smul.addr %s161, 16
        %s163 = scalar_lea.vmem [#allocation2], %s162
        %p164 = scmp.lt.s32.totalorder %s17, 1
        %s165 = scalar_select %p164, %s17, 1
        %s166 = smul.addr %s165, 3
        %s167 = smul.addr %s166, 8
        %s168 = scalar_lea.vmem %s0, %s167
        %v169 = vld [vmem:[%s168] sm:$0xff]
        %v170 = vld [vmem:[%s168 + $0x8] sm:$0xff]
        %v171 = vld [vmem:[%s1] sm:$0xf]
        %v172 = vld [vmem:[%s168 + $0x1] sm:$0xff]
        %v173 = vld [vmem:[%s168 + $0x9] sm:$0xff]
        %s174 = scalar_lea.vmem %s1, 4
        %v175 = vld [vmem:[%s174] sm:$0xf]
        %vm176 = vcmask 31744
        %v178 = vsel %vm176, %v172, 0
        %v181 = vsel %vm176, %v173, 0
        %vm183 = vcmask 1043456
        %v185 = vsel %vm183, %v175, 0
        %187 = vmatprep.subr.mxu0 0.0
        %188 = vmatpush1.msra.mxu0 %v185
        %189 = vmatprep.subr.mxu0 0.0
        %190 = vmatpush1.msra.mxu0 0.0
        %191 = vmatprep.subr.mxu0 0.0
        %192 = vmatpush1.msra.mxu0 0.0
        %193 = vmatprep.subr.mxu0 0.0
        %194 = vmatpush1.msra.mxu0 0.0
        %195 = vmatprep.subr.mxu0 0.0
        %196 = vmatpush1.msra.mxu0 0.0
        %197 = vmatprep.subr.mxu0 0.0
        %198 = vmatpush1.msra.mxu0 0.0
        %199 = vmatprep.subr.mxu0 0.0
        %200 = vmatpush1.msra.mxu0 0.0
        %201 = vmatprep.subr.mxu0 0.0
        %202 = vmatpush1.msra.mxu0 0.0
        %203 = vmatprep.subr.mxu0 0.0
        %204 = vmatpush1.msra.mxu0 0.0
        %205 = vmatprep.subr.mxu0 0.0
        %206 = vmatpush1.msra.mxu0 0.0
        %207 = vmatprep.subr.mxu0 0.0
        %208 = vmatpush1.msra.mxu0 0.0
        %209 = vmatprep.subr.mxu0 0.0
        %210 = vmatpush1.msra.mxu0 0.0
        %211 = vmatprep.subr.mxu0 0.0
        %212 = vmatpush1.msra.mxu0 0.0
        %213 = vmatprep.subr.mxu0 0.0
        %214 = vmatpush1.msra.mxu0 0.0
        %215 = vmatprep.subr.mxu0 0.0
        %216 = vmatpush1.msra.mxu0 0.0
        %217 = vmatprep.subr.mxu0 0.0
        %218 = vmatpush1.msra.mxu0 0.0
        %219 = vmatprep.subr.mxu0 0.0
        %220 = vmatpush1.msra.mxu0 0.0
        %221 = vmatprep.subr.mxu0 0.0
        %222 = vmatpush1.msra.mxu0 0.0
        %223 = vmatprep.subr.mxu0 0.0
        %224 = vmatpush1.msra.mxu0 0.0
        %225 = vmatprep.subr.mxu0 0.0
        %226 = vmatpush1.msra.mxu0 0.0
        %227 = vmatprep.subr.mxu0 0.0
        %228 = vmatpush1.msra.mxu0 0.0
        %229 = vmatprep.subr.mxu0 0.0
        %230 = vmatpush1.msra.mxu0 0.0
        %231 = vmatprep.subr.mxu0 0.0
        %232 = vmatpush1.msra.mxu0 0.0
        %233 = vmatprep.subr.mxu0 0.0
        %234 = vmatpush1.msra.mxu0 0.0
        %235 = vmatprep.subr.mxu0 0.0
        %236 = vmatpush1.msra.mxu0 0.0
        %237 = vmatprep.subr.mxu0 0.0
        %238 = vmatpush1.msra.mxu0 0.0
        %239 = vmatprep.subr.mxu0 0.0
        %240 = vmatpush1.msra.mxu0 0.0
        %241 = vmatprep.subr.mxu0 0.0
        %242 = vmatpush1.msra.mxu0 0.0
        %243 = vmatprep.subr.mxu0 0.0
        %244 = vmatpush1.msra.mxu0 0.0
        %245 = vmatprep.subr.mxu0 0.0
        %246 = vmatpush1.msra.mxu0 0.0
        %247 = vmatprep.subr.mxu0 0.0
        %248 = vmatpush1.msra.mxu0 0.0
        %249 = vmatprep.subr.mxu0 0.0
        %250 = vmatpush1.msra.mxu0 0.0
        %251 = vmatprep.mubr.f32.mxu0 0.0
        %252 = vmatmul.mubr.f32.gmra.mrb[0].mxu0 %v178
        %v253 = vpop.f32.mrb[0].mxu0
        %v254 = vadd.f32 0.0, %v253
        %v255 = vpop.f32.mrb[0].mxu0
        %256 = vmatprep.mubr.f32.mxu0 0.0
        %257 = vmatmul.mubr.f32.gmra.mrb[0].mxu0 %v181
        %v258 = vpop.f32.mrb[0].mxu0
        %v259 = vadd.f32 0.0, %v258
        %v260 = vpop.f32.mrb[0].mxu0
        %261 = vdwg.mxu0
        %v263 = vsel %vm176, %v169, 0
        %v266 = vsel %vm176, %v170, 0
        %v269 = vsel %vm183, %v171, 0
        %271 = vmatprep.subr.mxu0 0.0
        %272 = vmatpush1.msra.mxu0 %v269
        %273 = vmatprep.subr.mxu0 0.0
        %274 = vmatpush1.msra.mxu0 0.0
        %275 = vmatprep.subr.mxu0 0.0
        %276 = vmatpush1.msra.mxu0 0.0
        %277 = vmatprep.subr.mxu0 0.0
        %278 = vmatpush1.msra.mxu0 0.0
        %279 = vmatprep.subr.mxu0 0.0
        %280 = vmatpush1.msra.mxu0 0.0
        %281 = vmatprep.subr.mxu0 0.0
        %282 = vmatpush1.msra.mxu0 0.0
        %283 = vmatprep.subr.mxu0 0.0
        %284 = vmatpush1.msra.mxu0 0.0
        %285 = vmatprep.subr.mxu0 0.0
        %286 = vmatpush1.msra.mxu0 0.0
        %287 = vmatprep.subr.mxu0 0.0
        %288 = vmatpush1.msra.mxu0 0.0
        %289 = vmatprep.subr.mxu0 0.0
        %290 = vmatpush1.msra.mxu0 0.0
        %291 = vmatprep.subr.mxu0 0.0
        %292 = vmatpush1.msra.mxu0 0.0
        %293 = vmatprep.subr.mxu0 0.0
        %294 = vmatpush1.msra.mxu0 0.0
        %295 = vmatprep.subr.mxu0 0.0
        %296 = vmatpush1.msra.mxu0 0.0
        %297 = vmatprep.subr.mxu0 0.0
        %298 = vmatpush1.msra.mxu0 0.0
        %299 = vmatprep.subr.mxu0 0.0
        %300 = vmatpush1.msra.mxu0 0.0
        %301 = vmatprep.subr.mxu0 0.0
        %302 = vmatpush1.msra.mxu0 0.0
        %303 = vmatprep.subr.mxu0 0.0
        %304 = vmatpush1.msra.mxu0 0.0
        %305 = vmatprep.subr.mxu0 0.0
        %306 = vmatpush1.msra.mxu0 0.0
        %307 = vmatprep.subr.mxu0 0.0
        %308 = vmatpush1.msra.mxu0 0.0
        %309 = vmatprep.subr.mxu0 0.0
        %310 = vmatpush1.msra.mxu0 0.0
        %311 = vmatprep.subr.mxu0 0.0
        %312 = vmatpush1.msra.mxu0 0.0
        %313 = vmatprep.subr.mxu0 0.0
        %314 = vmatpush1.msra.mxu0 0.0
        %315 = vmatprep.subr.mxu0 0.0
        %316 = vmatpush1.msra.mxu0 0.0
        %317 = vmatprep.subr.mxu0 0.0
        %318 = vmatpush1.msra.mxu0 0.0
        %319 = vmatprep.subr.mxu0 0.0
        %320 = vmatpush1.msra.mxu0 0.0
        %321 = vmatprep.subr.mxu0 0.0
        %322 = vmatpush1.msra.mxu0 0.0
        %323 = vmatprep.subr.mxu0 0.0
        %324 = vmatpush1.msra.mxu0 0.0
        %325 = vmatprep.subr.mxu0 0.0
        %326 = vmatpush1.msra.mxu0 0.0
        %327 = vmatprep.subr.mxu0 0.0
        %328 = vmatpush1.msra.mxu0 0.0
        %329 = vmatprep.subr.mxu0 0.0
        %330 = vmatpush1.msra.mxu0 0.0
        %331 = vmatprep.subr.mxu0 0.0
        %332 = vmatpush1.msra.mxu0 0.0
        %333 = vmatprep.subr.mxu0 0.0
        %334 = vmatpush1.msra.mxu0 0.0
        %335 = vmatprep.mubr.f32.mxu0 0.0
        %336 = vmatmul.mubr.f32.gmra.mrb[0].mxu0 %v263
        %v337 = vpop.f32.mrb[0].mxu0
        %v338 = vadd.f32 %v254, %v337
        %v339 = vpop.f32.mrb[0].mxu0
        %340 = vmatprep.mubr.f32.mxu0 0.0
        %341 = vmatmul.mubr.f32.gmra.mrb[0].mxu0 %v266
        %v342 = vpop.f32.mrb[0].mxu0
        %v343 = vadd.f32 %v259, %v342
        %v344 = vpop.f32.mrb[0].mxu0
        %345 = vdwg.mxu0
        %v346 = vld [vmem:[%s168 + $0x2] sm:$0xff]
        %v347 = vld [vmem:[%s168 + $0xa] sm:$0xff]
        %s348 = scalar_lea.vmem %s1, 8
        %v349 = vld [vmem:[%s348] sm:$0xf]
        %v351 = vsel %vm176, %v346, 0
        %v354 = vsel %vm176, %v347, 0
        %v357 = vsel %vm183, %v349, 0
        %359 = vmatprep.subr.mxu0 0.0
        %360 = vmatpush1.msra.mxu0 %v357
        %361 = vmatprep.subr.mxu0 0.0
        %362 = vmatpush1.msra.mxu0 0.0
        %363 = vmatprep.subr.mxu0 0.0
        %364 = vmatpush1.msra.mxu0 0.0
        %365 = vmatprep.subr.mxu0 0.0
        %366 = vmatpush1.msra.mxu0 0.0
        %367 = vmatprep.subr.mxu0 0.0
        %368 = vmatpush1.msra.mxu0 0.0
        %369 = vmatprep.subr.mxu0 0.0
        %370 = vmatpush1.msra.mxu0 0.0
        %371 = vmatprep.subr.mxu0 0.0
        %372 = vmatpush1.msra.mxu0 0.0
        %373 = vmatprep.subr.mxu0 0.0
        %374 = vmatpush1.msra.mxu0 0.0
        %375 = vmatprep.subr.mxu0 0.0
        %376 = vmatpush1.msra.mxu0 0.0
        %377 = vmatprep.subr.mxu0 0.0
        %378 = vmatpush1.msra.mxu0 0.0
        %379 = vmatprep.subr.mxu0 0.0
        %380 = vmatpush1.msra.mxu0 0.0
        %381 = vmatprep.subr.mxu0 0.0
        %382 = vmatpush1.msra.mxu0 0.0
        %383 = vmatprep.subr.mxu0 0.0
        %384 = vmatpush1.msra.mxu0 0.0
        %385 = vmatprep.subr.mxu0 0.0
        %386 = vmatpush1.msra.mxu0 0.0
        %387 = vmatprep.subr.mxu0 0.0
        %388 = vmatpush1.msra.mxu0 0.0
        %389 = vmatprep.subr.mxu0 0.0
        %390 = vmatpush1.msra.mxu0 0.0
        %391 = vmatprep.subr.mxu0 0.0
        %392 = vmatpush1.msra.mxu0 0.0
        %393 = vmatprep.subr.mxu0 0.0
        %394 = vmatpush1.msra.mxu0 0.0
        %395 = vmatprep.subr.mxu0 0.0
        %396 = vmatpush1.msra.mxu0 0.0
        %397 = vmatprep.subr.mxu0 0.0
        %398 = vmatpush1.msra.mxu0 0.0
        %399 = vmatprep.subr.mxu0 0.0
        %400 = vmatpush1.msra.mxu0 0.0
        %401 = vmatprep.subr.mxu0 0.0
        %402 = vmatpush1.msra.mxu0 0.0
        %403 = vmatprep.subr.mxu0 0.0
        %404 = vmatpush1.msra.mxu0 0.0
        %405 = vmatprep.subr.mxu0 0.0
        %406 = vmatpush1.msra.mxu0 0.0
        %407 = vmatprep.subr.mxu0 0.0
        %408 = vmatpush1.msra.mxu0 0.0
        %409 = vmatprep.subr.mxu0 0.0
        %410 = vmatpush1.msra.mxu0 0.0
        %411 = vmatprep.subr.mxu0 0.0
        %412 = vmatpush1.msra.mxu0 0.0
        %413 = vmatprep.subr.mxu0 0.0
        %414 = vmatpush1.msra.mxu0 0.0
        %415 = vmatprep.subr.mxu0 0.0
        %416 = vmatpush1.msra.mxu0 0.0
        %417 = vmatprep.subr.mxu0 0.0
        %418 = vmatpush1.msra.mxu0 0.0
        %419 = vmatprep.subr.mxu0 0.0
        %420 = vmatpush1.msra.mxu0 0.0
        %421 = vmatprep.subr.mxu0 0.0
        %422 = vmatpush1.msra.mxu0 0.0
        %423 = vmatprep.mubr.f32.mxu0 0.0
        %424 = vmatmul.mubr.f32.gmra.mrb[0].mxu0 %v351
        %v425 = vpop.f32.mrb[0].mxu0
        %v426 = vadd.f32 0.0, %v425
        %v427 = vpop.f32.mrb[0].mxu0
        %428 = vmatprep.mubr.f32.mxu0 0.0
        %429 = vmatmul.mubr.f32.gmra.mrb[0].mxu0 %v354
        %v430 = vpop.f32.mrb[0].mxu0
        %v431 = vadd.f32 0.0, %v430
        %v432 = vpop.f32.mrb[0].mxu0
        %433 = vdwg.mxu0
        %v434 = vadd.f32 %v338, %v426
        %v435 = vadd.f32 %v343, %v431
        %v436 = vld [vmem:[%s2] sm:$0x1]
        %v438 = vlaneseq
        %v439 = vshrl.u32 %v438, 7
        %v440 = vsub.s32 0, %v439
        %v441 = vrot.slane %v436, %v440
        %v443 = vadd.f32 %v434, %v441
        %v444 = vadd.f32 %v435, %v441
        %445 = vst [vmem:[%s163] sm:$0xff] %v443
        %446 = vst [vmem:[%s163 + $0x8] sm:$0xff] %v444
        %s447 = sand.u32 %s93, 1
        %s448 = scalar_lea.sflag [#allocation3], %s447
        %s449 = sand.u32 %s93, 1
        %s450 = smul.addr %s449, 16
        %s451 = scalar_lea.vmem [#allocation2], %s450
        // Predicated region
        $region33: #{tpu_custom_call.1} parent=31 // pred_check
          %p452 = pneg %p103
        $region34: #{tpu_custom_call.1} parent=31 // pred_check_branch
          %454 = sbr.rel (%p452) target = $region36
        $region35: #{tpu_custom_call.1} parent=31 // pred_region
          %s456 = ssub.s32 256, 256
          %457 = vsyncadd %s448, %s456
          %s458 = smul.addr %s17, 2
          %s459 = smul.addr %s458, 128
          %s460 = scalar_lea.hbm %s3, %s459
          %s461 = sshll.u32 %s451, 4
          %s462 = int_to_ptr.vmem [resolvable:$true] %s461
          %467 = dma.vmem_to_hbm [thread:$0]  %s462, 256, %s460, %s448, 128, 128, 8
        $region36: #{tpu_custom_call.1} parent=31 // pred_fallthru
          _
      $region32: #{tpu_custom_call.1} parent=5 // pred_fallthru
        _
      %p468 = scmp.le.s32.totalorder 2, %s12
      // Predicated region
      $region37: #{tpu_custom_call.1} parent=5 // pred_check
        %p469 = pneg %p468
      $region38: #{tpu_custom_call.1} parent=5 // pred_check_branch
        %471 = sbr.rel (%p469) target = $region40
      $region39: #{tpu_custom_call.1} parent=5 // pred_region
        %s472 = ssub.s32 %s12, 2
        // Predicated region
        $region41: #{tpu_custom_call.1} parent=39 // pred_check
          %p473 = pneg %p109
        $region42: #{tpu_custom_call.1} parent=39 // pred_check_branch
          %475 = sbr.rel (%p473) target = $region44
        $region43: #{tpu_custom_call.1} parent=39 // pred_region
          %s476 = sand.u32 %s94, 1
          %s477 = scalar_lea.sflag [#allocation3], %s476
          %s478 = sand.u32 %s94, 1
          %s479 = smul.addr %s478, 16
          %s480 = scalar_lea.vmem [#allocation2], %s479
          %481 = dma.done %s477, 256
        $region44: #{tpu_custom_call.1} parent=39 // pred_fallthru
          _
      $region40: #{tpu_custom_call.1} parent=5 // pred_fallthru
        _
    $region6: #{tpu_custom_call.1} parent=1 // loop_footer
      %s16 = sadd.s32 1, %s12
    $region7: #{tpu_custom_call.1} parent=1 // loop_footer_branch
      %11 = sbr.rel target = $region3
    $region8: #{tpu_custom_call.1} parent=1 // loop_exit
      _
    %482 = vsyncpa [#allocation3], 1
    %s483 = scalar_lea.sflag [#allocation3], 1
    %484 = vsyncpa %s483, 1

</llo_original>
